<compile_context>
chip_gen: v7x
topology: tpu7x:2x2x1
jax: 0.10.0
libtpu: 0.0.40
codegen_flags: <defaults>
</compile_context>

<pallas_src>
import functools

import jax
import jax.numpy as jnp
from jax import lax
from jax.experimental import pallas as pl
from jax.experimental.pallas import tpu as pltpu


def _round_up(x, n):
    return ((x + n - 1) // n) * n


def _vmem_limit_bytes():
    """Generation-aware VMEM limit: ~half of physical, capped at 96 MiB."""
    try:
        cap = int(pltpu.get_tpu_info().vmem_capacity_bytes)
    except Exception:
        cap = 64 * 1024 * 1024  # conservative fallback (v7x-sized)
    return min(cap // 2, 96 * 1024 * 1024)


def _pick_block_rows(m, h, has_z, in_itemsize, vmem_limit, requested):
    """Row tile sized against a budget derived from the actual VMEM limit."""
    row_align = 16  # bf16 output packs 16 rows per sublane group
    if requested is not None:
        br = max(row_align, _round_up(requested, row_align))
    else:
        budget = (3 * vmem_limit) // 4          # headroom for Pallas scratch
        budget -= 2 * h * 4                     # resident weight + mask slabs
        n_in = 2 if has_z else 1
        # double-buffered DMA buffers: inputs (real itemsize) + bf16 output
        dma_bytes_per_row = (n_in * in_itemsize + 2) * h * 2
        # f32 temporaries live at once (x, x*x / out) -- silu_z is no longer
        # held across the norm, so 3 slabs is a safe upper bound.
        tmp_bytes_per_row = 3 * h * 4
        br = budget // max(1, dma_bytes_per_row + tmp_bytes_per_row)
        br = max(row_align, min(2048, (br // row_align) * row_align))
    # Guarantee >= ~8 grid steps when M allows it (pipeline overlap + v7x
    # megacore sharding of the single "parallel" grid axis).
    min_steps = 8
    if m >= min_steps * row_align:
        br = min(br, _round_up(pl.cdiv(m, min_steps), row_align))
    # Never exceed the (16-row-padded) problem size.
    br = min(br, _round_up(m, row_align))
    return max(row_align, br)


def _rmsnorm_body(x_ref, z_ref, w_ref, mask_ref, o_ref, *, eps, group_size,
                  norm_before_gate, has_z):
    x = x_ref[...].astype(jnp.float32)           # (TM, H)
    w = w_ref[...].astype(jnp.float32)           # (1,  H)
    tm, h = x.shape
    g = h // group_size
    inv_gs = jnp.float32(1.0 / group_size)

    if has_z and not norm_before_gate:
        z = z_ref[...].astype(jnp.float32)
        x = x * (z * jax.nn.sigmoid(z))          # sigmoid rides the EUP slot

    xx = x * x
    if g == 1:
        # Single group: plain row reduce over the lane axis.
        ms = jnp.sum(xx, axis=-1, keepdims=True) * inv_gs       # (TM, 1)
        rstd = lax.rsqrt(ms + eps)                               # EUP
        out = x * rstd * w
    elif group_size % 128 == 0:
        # Lane-aligned groups: the reshape stays layout-friendly.
        xg = xx.reshape(tm, g, group_size)
        ms = jnp.sum(xg, axis=-1, keepdims=True) * inv_gs        # (TM, g, 1)
        rstd = lax.rsqrt(ms + eps)
        out = (x.reshape(tm, g, group_size) * rstd).reshape(tm, h) * w
    else:
        # Sub-128 groups: segment-sum + broadcast-back on the otherwise idle
        # MXU using a resident 0/1 mask (hoisted to a kernel operand).
        # Default dot precision (single MXU pass); error ~2^-8 rel, far inside
        # the bf16 output precision.
        mask = mask_ref[...]                                     # (H, g) 0/1
        ms = jnp.dot(xx, mask, preferred_element_type=jnp.float32) * inv_gs
        rstd = lax.rsqrt(ms + eps)                               # (TM, g)
        rstd_full = jnp.dot(rstd, mask.T,
                            preferred_element_type=jnp.float32)  # (TM, H)
        out = x * rstd_full * w

    if has_z and norm_before_gate:
        # Read z again here instead of keeping a f32 silu(z) slab live across
        # the whole norm (one fewer (TM,H) f32 temporary).
        z = z_ref[...].astype(jnp.float32)
        out = out * (z * jax.nn.sigmoid(z))

    o_ref[...] = out.astype(o_ref.dtype)


def mamba2_rmsnorm(x, weight, z=None, *, eps=1e-5, group_size=None,
                   norm_before_gate=True, block_rows=None):
    """Pallas implementation of Mamba2RMSNorm.forward (bias is always None)."""
    orig_shape = x.shape
    h = orig_shape[-1]
    gs = h if group_size is None else group_size
    assert h % gs == 0
    g = h // gs

    m = 1
    for d in orig_shape[:-1]:
        m *= d
    x2 = x.reshape(m, h)
    w2 = weight.reshape(1, h)
    has_z = z is not None
    need_mask = (g > 1) and (gs % 128 != 0)

    vmem_limit = _vmem_limit_bytes()
    br = _pick_block_rows(m, h, has_z, jnp.dtype(x.dtype).itemsize,
                          vmem_limit, block_rows)
    grid = (pl.cdiv(m, br),)   # Pallas pads the trailing partial row block

    row_spec = pl.BlockSpec((br, h), lambda i: (i, 0))
    w_spec = pl.BlockSpec((1, h), lambda i: (0, 0))

    operands = [x2]
    in_specs = [row_spec]
    if has_z:
        operands.append(z.reshape(m, h))
        in_specs.append(row_spec)
    operands.append(w2)
    in_specs.append(w_spec)
    if need_mask:
        # 0/1 group-membership mask, computed once and resident across steps.
        mask = (lax.broadcasted_iota(jnp.int32, (h, g), 0) // gs
                == lax.broadcasted_iota(jnp.int32, (h, g), 1)
                ).astype(jnp.float32)
        operands.append(mask)
        in_specs.append(pl.BlockSpec((h, g), lambda i: (0, 0)))

    body = functools.partial(_rmsnorm_body, eps=eps, group_size=gs,
                             norm_before_gate=norm_before_gate, has_z=has_z)

    def kernel(*refs):
        it = iter(refs)
        x_ref = next(it)
        z_ref = next(it) if has_z else None
        w_ref = next(it)
        mask_ref = next(it) if need_mask else None
        o_ref = next(it)
        body(x_ref, z_ref, w_ref, mask_ref, o_ref)

    # Advisory roofline hint for the XLA scheduler (HBM-bound elementwise op).
    in_itemsize = jnp.dtype(x.dtype).itemsize
    in_bytes = m * h * in_itemsize * (2 if has_z else 1)
    bytes_accessed = in_bytes + m * h * 2 + h * jnp.dtype(weight.dtype).itemsize
    cost = pl.CostEstimate(
        flops=(8 if has_z else 4) * m * h,
        transcendentals=(m * h if has_z else 0) + m * g,
        bytes_accessed=bytes_accessed,
    )

    out = pl.pallas_call(
        kernel,
        out_shape=jax.ShapeDtypeStruct((m, h), jnp.bfloat16),
        grid_spec=pltpu.PrefetchScalarGridSpec(
            num_scalar_prefetch=0,
            grid=grid,
            in_specs=in_specs,
            out_specs=row_spec,
        ),
        compiler_params=pltpu.CompilerParams(
            dimension_semantics=("parallel",),
            vmem_limit_bytes=vmem_limit,
        ),
        cost_estimate=cost,
    )(*operands)
    return out.reshape(orig_shape)


def _ref_rmsnorm(x, weight, z=None, eps=1e-5, group_size=None,
                 norm_before_gate=True):
    """Pure-JAX reference mirroring the PyTorch _rms_norm_ref."""
    xf = x.astype(jnp.float32)
    wf = weight.astype(jnp.float32)
    h = x.shape[-1]
    gs = h if group_size is None else group_size
    silu_z = None
    if z is not None:
        zf = z.astype(jnp.float32)
        silu_z = zf * jax.nn.sigmoid(zf)
        if not norm_before_gate:
            xf = xf * silu_z
    xg = xf.reshape(x.shape[:-1] + (h // gs, gs))
    rstd = 1.0 / jnp.sqrt(jnp.mean(xg * xg, axis=-1, keepdims=True) + eps)
    out = (xg * rstd).reshape(x.shape) * wf
    if z is not None and norm_before_gate:
        out = out * silu_z
    return out.astype(jnp.bfloat16)


if __name__ == "__main__":
    batch, seq, hidden = 2, 8, 32
    eps = 1e-5

    key = jax.random.PRNGKey(0)
    kx, kz = jax.random.split(key)
    x = jax.random.normal(kx, (batch, seq, hidden), dtype=jnp.float32).astype(jnp.bfloat16)
    z = jax.random.normal(kz, (batch, seq, hidden), dtype=jnp.float32).astype(jnp.bfloat16)
    # reset_parameters() initializes weight to ones (deterministic).
    weight = jnp.ones((hidden,), dtype=jnp.float32)

    # Case 1: group_size=None (single group), norm_before_gate=True, with z.
    out1 = mamba2_rmsnorm(x, weight, z=z, eps=eps, group_size=None,
                          norm_before_gate=True)
    jax.block_until_ready(out1)
    ref1 = _ref_rmsnorm(x, weight, z=z, eps=eps, group_size=None,
                        norm_before_gate=True)
    assert out1.dtype == jnp.bfloat16
    assert jnp.allclose(out1.astype(jnp.float32), ref1.astype(jnp.float32),
                        rtol=2e-2, atol=2e-2)

    # Case 2: grouped norm (group_size=8 -> MXU segment-sum path with the
    #         resident mask operand), norm_before_gate=False, with z.
    out2 = mamba2_rmsnorm(x, weight, z=z, eps=eps, group_size=8,
                          norm_before_gate=False)
    jax.block_until_ready(out2)
    ref2 = _ref_rmsnorm(x, weight, z=z, eps=eps, group_size=8,
                        norm_before_gate=False)
    assert jnp.allclose(out2.astype(jnp.float32), ref2.astype(jnp.float32),
                        rtol=2e-2, atol=2e-2)

    # Case 3: no gate z.
    out3 = mamba2_rmsnorm(x, weight, z=None, eps=eps)
    jax.block_until_ready(out3)
    ref3 = _ref_rmsnorm(x, weight, z=None, eps=eps)
    assert jnp.allclose(out3.astype(jnp.float32), ref3.astype(jnp.float32),
                        rtol=2e-2, atol=2e-2)

    # Case 4: row count not divisible by the row tile (exercises the
    #         cdiv-padded trailing block; padded rows are discarded).
    x4 = x[:, :5, :]
    z4 = z[:, :5, :]
    out4 = mamba2_rmsnorm(x4, weight, z=z4, eps=eps, group_size=None,
                          norm_before_gate=True)
    jax.block_until_ready(out4)
    ref4 = _ref_rmsnorm(x4, weight, z=z4, eps=eps, group_size=None,
                        norm_before_gate=True)
    assert jnp.allclose(out4.astype(jnp.float32), ref4.astype(jnp.float32),
                        rtol=2e-2, atol=2e-2)

    # Case 5: fp32 inputs (exercises the itemsize-aware VMEM picker).
    out5 = mamba2_rmsnorm(x.astype(jnp.float32), weight,
                          z=z.astype(jnp.float32), eps=eps)
    jax.block_until_ready(out5)
    ref5 = _ref_rmsnorm(x.astype(jnp.float32), weight,
                        z=z.astype(jnp.float32), eps=eps)
    assert jnp.allclose(out5.astype(jnp.float32), ref5.astype(jnp.float32),
                        rtol=2e-2, atol=2e-2)

    print("KERNEL_OK")
</pallas_src>

<mosaic_0001>
module attributes {stable_mosaic.version = 11 : i64} {
  func.func @kernel(%arg0: i32, %arg1: memref<16x32xbf16, #tpu.memory_space<vmem>>, %arg2: memref<16x32xbf16, #tpu.memory_space<vmem>>, %arg3: memref<1x32xf32, #tpu.memory_space<vmem>>, %arg4: memref<16x32xbf16, #tpu.memory_space<vmem>>) attributes {dimension_semantics = [#tpu.dimension_semantics<parallel>], iteration_bounds = array<i64: 1>, scalar_prefetch = 0 : i64, scratch_operands = 0 : i64, tpu.core_type = #tpu.core_type<tc>, window_params = [{transform_indices = @transform_0, window_bounds = array<i64: 16, 32>}, {transform_indices = @transform_1, window_bounds = array<i64: 16, 32>}, {pipeline_mode = #tpu.pipeline_mode<synchronous>, transform_indices = @transform_2, window_bounds = array<i64: 1, 32>}, {transform_indices = @transform_3, window_bounds = array<i64: 16, 32>}]} {
    %c0 = arith.constant 0 : index
    %c0_0 = arith.constant 0 : index
    %0 = vector.load %arg1[%c0, %c0_0] : memref<16x32xbf16, #tpu.memory_space<vmem>>, vector<16x32xbf16>
    %1 = arith.extf %0 : vector<16x32xbf16> to vector<16x32xf32>
    %c0_1 = arith.constant 0 : index
    %c0_2 = arith.constant 0 : index
    %2 = vector.load %arg3[%c0_1, %c0_2] : memref<1x32xf32, #tpu.memory_space<vmem>>, vector<1x32xf32>
    %3 = arith.mulf %1, %1 : vector<16x32xf32>
    %cst = arith.constant dense<0.000000e+00> : vector<16xf32>
    %4 = vector.multi_reduction <add>, %3, %cst [1] : vector<16x32xf32> to vector<16xf32>
    %5 = vector.shape_cast %4 : vector<16xf32> to vector<16x1xf32>
    %cst_3 = arith.constant 3.125000e-02 : f32
    %6 = vector.broadcast %cst_3 : f32 to vector<16x1xf32>
    %7 = arith.mulf %5, %6 : vector<16x1xf32>
    %cst_4 = arith.constant 9.99999974E-6 : f32
    %8 = vector.broadcast %cst_4 : f32 to vector<16x1xf32>
    %9 = arith.addf %7, %8 : vector<16x1xf32>
    %10 = math.rsqrt %9 : vector<16x1xf32>
    %11 = vector.broadcast %10 : vector<16x1xf32> to vector<16x32xf32>
    %12 = arith.mulf %1, %11 : vector<16x32xf32>
    %13 = vector.broadcast %2 : vector<1x32xf32> to vector<16x32xf32>
    %14 = arith.mulf %12, %13 : vector<16x32xf32>
    %c0_5 = arith.constant 0 : index
    %c0_6 = arith.constant 0 : index
    %15 = vector.load %arg2[%c0_5, %c0_6] : memref<16x32xbf16, #tpu.memory_space<vmem>>, vector<16x32xbf16>
    %16 = arith.extf %15 : vector<16x32xbf16> to vector<16x32xf32>
    %17 = arith.negf %16 : vector<16x32xf32>
    %18 = math.exp %17 : vector<16x32xf32>
    %cst_7 = arith.constant 1.000000e+00 : f32
    %19 = vector.broadcast %cst_7 : f32 to vector<16x32xf32>
    %20 = arith.addf %19, %18 : vector<16x32xf32>
    %21 = arith.divf %19, %20 : vector<16x32xf32>
    %22 = arith.mulf %16, %21 : vector<16x32xf32>
    %23 = arith.mulf %14, %22 : vector<16x32xf32>
    %24 = arith.truncf %23 : vector<16x32xf32> to vector<16x32xbf16>
    %c0_8 = arith.constant 0 : index
    %c0_9 = arith.constant 0 : index
    %25 = vector.load %arg4[%c0_8, %c0_9] : memref<16x32xbf16, #tpu.memory_space<vmem>>, vector<16x32xbf16>
    tpu.vector_store %arg4[%c0_8, %c0_9], %24 {strides = array<i32>} : memref<16x32xbf16, #tpu.memory_space<vmem>>, vector<16x32xbf16>,
    return
  }
  func.func @transform_0(%arg0: i32) -> (i32, i32) {
    %c0_i32 = arith.constant 0 : i32
    %c0_i32_0 = arith.constant 0 : i32
    return %arg0, %c0_i32 : i32, i32
  }
  func.func @transform_1(%arg0: i32) -> (i32, i32) {
    %c0_i32 = arith.constant 0 : i32
    %c0_i32_0 = arith.constant 0 : i32
    return %arg0, %c0_i32 : i32, i32
  }
  func.func @transform_2(%arg0: i32) -> (i32, i32) {
    %c0_i32 = arith.constant 0 : i32
    %c0_i32_0 = arith.constant 0 : i32
    %c0_i32_1 = arith.constant 0 : i32
    return %c0_i32, %c0_i32_0 : i32, i32
  }
  func.func @transform_3(%arg0: i32) -> (i32, i32) {
    %c0_i32 = arith.constant 0 : i32
    %c0_i32_0 = arith.constant 0 : i32
    return %arg0, %c0_i32 : i32, i32
  }
}

</mosaic_0001>

<llo_original>
// kernel: tpu_custom_call.1
$region0: #{tpu_custom_call.1}
  #allocation0 [shape = 'u32[]', space=smem, size = 0x4, offset = 0x4, fixed_abs, tag = 'smem constant byte address 0x4 - core index']
  #allocation1 [shape = 'u32[144,128]{1,0:T(1,128)}', space=vmem, size = 0x12000, scoped, tag = 'internal scratch']
  %s0 = inlined_call_operand.hbm [shape: bf16[16,32], index: 0, kind: input, shape index: {}]
  %s1 = inlined_call_operand.hbm [shape: bf16[16,32], index: 1, kind: input, shape index: {}]
  %s2 = inlined_call_operand.vmem [shape: f32[1,32], index: 2, kind: input, shape index: {}]
  %s3 = inlined_call_operand.hbm [shape: bf16[16,32], index: 3, kind: output, shape index: {}]
  %s4 = sld [smem:[#allocation0]]
  $region30: #{tpu_custom_call.1} parent=0
    _
  %s6 = ssub.s32 1, %s4
  %s7 = scalar_select 0, %s6, %s4
  $region1: #{tpu_custom_call.1} parent=0
    #allocation2 [shape = 'u8[4096]{0}', space=vmem, size = 0x1000, scoped, tag = 'input window, operand 0, single buffered']
    #allocation3 [shape = 's32[1]{0}', space=sflag, size = 0x4, scoped, tag = 'scoped memory for tpu_custom_call.1']
    #allocation4 [shape = 's32[1]{0}', space=sflag, size = 0x4, scoped, tag = 'scoped memory for tpu_custom_call.1']
    #allocation5 [shape = 'u8[4096]{0}', space=vmem, size = 0x1000, scoped, tag = 'input window, operand 1, single buffered']
    #allocation6 [shape = 's32[1]{0}', space=sflag, size = 0x4, scoped, tag = 'scoped memory for tpu_custom_call.1']
    #allocation7 [shape = 'u8[4096]{0}', space=vmem, size = 0x1000, scoped, tag = 'output window, operand 0, single buffered']
    %8 = vsyncpa [#allocation3], 0
    %9 = vsyncpa [#allocation6], 0
    %10 = vsyncpa [#allocation4], 0
    // Predicated region
    $region2: #{tpu_custom_call.1} parent=1 // pred_check
      _
    $region3: #{tpu_custom_call.1} parent=1 // pred_check_branch
      %12 = sbr.rel (0) target = $region5
    $region4: #{tpu_custom_call.1} parent=1 // pred_region
      %s14 = ssub.s32 128, 128
      %15 = vsyncadd [#allocation3], %s14
      %s16 = sshll.u32 [#allocation2], 4
      %s17 = int_to_ptr.vmem [resolvable:$true] %s16
      %22 = dma.hbm_to_vmem [thread:$0]  %s0, 128, %s17, [#allocation3], 64, 64, 4
    $region5: #{tpu_custom_call.1} parent=1 // pred_fallthru
      _
    // Predicated region
    $region6: #{tpu_custom_call.1} parent=1 // pred_check
      _
    $region7: #{tpu_custom_call.1} parent=1 // pred_check_branch
      %24 = sbr.rel (0) target = $region9
    $region8: #{tpu_custom_call.1} parent=1 // pred_region
      %s26 = ssub.s32 128, 128
      %27 = vsyncadd [#allocation6], %s26
      %s28 = sshll.u32 [#allocation5], 4
      %s29 = int_to_ptr.vmem [resolvable:$true] %s28
      %34 = dma.hbm_to_vmem [thread:$0]  %s1, 128, %s29, [#allocation6], 64, 64, 4
    $region9: #{tpu_custom_call.1} parent=1 // pred_fallthru
      _
    // Predicated region
    $region10: #{tpu_custom_call.1} parent=1 // pred_check
      _
    $region11: #{tpu_custom_call.1} parent=1 // pred_check_branch
      %36 = sbr.rel (0) target = $region13
    $region12: #{tpu_custom_call.1} parent=1 // pred_region
      _
    $region13: #{tpu_custom_call.1} parent=1 // pred_fallthru
      _
    // Predicated region
    $region14: #{tpu_custom_call.1} parent=1 // pred_check
      _
    $region15: #{tpu_custom_call.1} parent=1 // pred_check_branch
      %38 = sbr.rel (0) target = $region17
    $region16: #{tpu_custom_call.1} parent=1 // pred_region
      %39 = dma.done [#allocation3], 128
    $region17: #{tpu_custom_call.1} parent=1 // pred_fallthru
      _
    // Predicated region
    $region18: #{tpu_custom_call.1} parent=1 // pred_check
      _
    $region19: #{tpu_custom_call.1} parent=1 // pred_check_branch
      %41 = sbr.rel (0) target = $region21
    $region20: #{tpu_custom_call.1} parent=1 // pred_region
      %42 = dma.done [#allocation6], 128
    $region21: #{tpu_custom_call.1} parent=1 // pred_fallthru
      _
    %v43 = vld [vmem:[#allocation2] sm:$0xf]
    %v44 = vld [vmem:[#allocation2 + $0x4] sm:$0xf]
    %v45 = vunpack.c.l.bf16 %v43
    %v46 = vunpack.c.l.bf16 %v44
    %v47 = vld [vmem:[%s2] sm:$0x1]
    %v48 = vmul.f32 %v45, %v45
    %v49 = vmul.f32 %v46, %v46
    %vm50 = vcmask 261120
    %v51 = vsel %vm50, %v48, 0.0
    %52 = vadd.xlane.f32.xlu0 %v51
    %v53 = vpop.xlane.xlu0 %52
    %v54 = vsel %vm50, %v49, 0.0
    %55 = vadd.xlane.f32.xlu0 %v54
    %v56 = vpop.xlane.xlu0 %55
    %v57 = vmul.f32 %v53, 0.03125
    %v58 = vmul.f32 %v56, 0.03125
    %v59 = vadd.f32 %v57, 1e-05
    %v60 = vadd.f32 %v58, 1e-05
    %v61 = vrsqrt.pop %v59
    %v62 = vrsqrt.pop %v60
    %v63 = vmul.f32 %v45, %v61
    %v64 = vmul.f32 %v46, %v62
    %v66 = vlaneseq
    %v67 = vshrl.u32 %v66, 7
    %v68 = vsub.s32 0, %v67
    %v69 = vrot.slane %v47, %v68
    %v71 = vmul.f32 %v63, %v69
    %v72 = vmul.f32 %v64, %v69
    %v73 = vld [vmem:[#allocation5] sm:$0xf]
    %v74 = vld [vmem:[#allocation5 + $0x4] sm:$0xf]
    %v75 = vunpack.c.l.bf16 %v73
    %v76 = vunpack.c.l.bf16 %v74
    %v77 = vxor.u32 %v75, 2147483648
    %v78 = vxor.u32 %v76, 2147483648
    %v79 = vmul.f32 %v77, 1.442695
    %v80 = vpow.pop %v79
    %v81 = vmul.f32 %v78, 1.442695
    %v82 = vpow.pop %v81
    %v83 = vadd.f32 %v80, 1.0
    %v84 = vadd.f32 %v82, 1.0
    %v85 = vrcp.pop %v83
    %v86 = vmul.f32 1.0, %v85
    %v87 = vrcp.pop %v84
    %v88 = vmul.f32 1.0, %v87
    %v89 = vmul.f32 %v75, %v86
    %v90 = vmul.f32 %v76, %v88
    %v91 = vmul.f32 %v71, %v89
    %v92 = vmul.f32 %v72, %v90
    %v93 = vpack.c.bf16 %v92, %v91
    %v95 = vunpack.c.l.b16 %v93
    %v96 = vunpack.c.h.b16 %v93
    %v97 = vpack.c.b16 %v95, %v95
    %v98 = vpack.c.b16 %v96, %v96
    %vm101 = vcmask 257024
    %102 = vst.msk [vmem:[#allocation7] sm:$0xf] %vm101, %v97
    %103 = vst.msk [vmem:[#allocation7 + $0x4] sm:$0xf] %vm101, %v98
    // Predicated region
    $region22: #{tpu_custom_call.1} parent=1 // pred_check
      _
    $region23: #{tpu_custom_call.1} parent=1 // pred_check_branch
      %105 = sbr.rel (0) target = $region25
    $region24: #{tpu_custom_call.1} parent=1 // pred_region
      %s107 = ssub.s32 128, 128
      %108 = vsyncadd [#allocation4], %s107
      %s109 = sshll.u32 [#allocation7], 4
      %s110 = int_to_ptr.vmem [resolvable:$true] %s109
      %115 = dma.vmem_to_hbm [thread:$0]  %s110, 128, %s3, [#allocation4], 64, 64, 4
    $region25: #{tpu_custom_call.1} parent=1 // pred_fallthru
      _
    // Predicated region
    $region26: #{tpu_custom_call.1} parent=1 // pred_check
      _
    $region27: #{tpu_custom_call.1} parent=1 // pred_check_branch
      %117 = sbr.rel (0) target = $region29
    $region28: #{tpu_custom_call.1} parent=1 // pred_region
      %118 = dma.done [#allocation4], 128
    $region29: #{tpu_custom_call.1} parent=1 // pred_fallthru
      _
    %119 = vsyncpa [#allocation3], 1
    %120 = vsyncpa [#allocation6], 1
    %121 = vsyncpa [#allocation4], 1

</llo_original>
